<compile_context>
chip_gen: v6e
topology: v6e:2x2x1
jax: 0.10.0
libtpu: 0.0.40
codegen_flags: <defaults>
</compile_context>

<pallas_src>
import jax
import jax.numpy as jnp
from jax.experimental import pallas as pl
from jax.experimental.pallas import tpu as pltpu


def _dma_copy_kernel(x_hbm, o_hbm, sem):
    # Single HBM -> HBM DMA of the whole array: no VMEM staging, no grid.
    copy = pltpu.make_async_copy(x_hbm, o_hbm, sem)
    copy.start()
    copy.wait()


def _lane_dense_2d(total):
    """Factor `total` elements into (rows, L) with L a multiple of 128
    (capped at 8192) when possible; otherwise (1, total).  The DMA is a
    contiguous byte copy either way, this just keeps the HBM view lane-dense."""
    if total % 128 != 0:
        return (1, total)
    L = min(8192, total)
    while L >= 128:
        if total % L == 0:
            return (total // L, L)
        L -= 128
    return (1, total)


def unflatten(x, out_channels, out_height, out_width):
    """Recommended path: torch's .view is metadata-only, and so is XLA's
    reshape — strictly faster than any copy kernel (perf review, item 1)."""
    return x.reshape(-1, out_channels, out_height, out_width)


def unflatten_pallas(x, out_channels, out_height, out_width):
    """Materializing variant: produces a fresh output buffer via one direct
    HBM->HBM DMA (no VMEM round-trip), then a metadata-only reshape to NCHW."""
    flat = out_channels * out_height * out_width
    total = x.size
    assert total % flat == 0, "input element count must be divisible by C*H*W"
    batch = total // flat

    rows, lanes = _lane_dense_2d(total)
    x2d = x.reshape(rows, lanes)  # metadata-only collapse to lane-dense 2-D

    out2d = pl.pallas_call(
        _dma_copy_kernel,
        out_shape=jax.ShapeDtypeStruct((rows, lanes), x.dtype),
        in_specs=[pl.BlockSpec(memory_space=pl.ANY)],
        out_specs=pl.BlockSpec(memory_space=pl.ANY),
        scratch_shapes=[pltpu.SemaphoreType.DMA],
    )(x2d)

    # Metadata-only reshape (glue) to NCHW.
    return out2d.reshape(batch, out_channels, out_height, out_width)


if __name__ == "__main__":
    # Small shapes consistent with the module: B=2, C=4, H=16, W=16
    B, C, H, W = 2, 4, 16, 16
    in_features = C * H * W

    key = jax.random.PRNGKey(0)
    x = jax.random.normal(key, (B, in_features), dtype=jnp.float32)

    # Reference of torch's .view, computed up front.
    ref = x.reshape(-1, C, H, W)

    # Zero-copy (production) path.
    out_view = unflatten(x, C, H, W)

    # Pallas materializing path (the kernel under test).
    out_copy = unflatten_pallas(x, C, H, W)
    out_copy = jax.block_until_ready(out_copy)

    assert out_copy.shape == (B, C, H, W), out_copy.shape
    assert out_copy.dtype == x.dtype
    assert jnp.array_equal(out_copy, ref)
    assert jnp.array_equal(out_view, ref)

    print("KERNEL_OK")
</pallas_src>

<mosaic_0001>
module attributes {stable_mosaic.version = 11 : i64} {
  func.func @_dma_copy_kernel(%arg0: memref<1x2048xf32, #tpu.memory_space<any>>, %arg1: memref<1x2048xf32, #tpu.memory_space<any>>, %arg2: memref<!tpu.dma_semaphore, #tpu.memory_space<semaphore_mem>>) attributes {dimension_semantics = [], scalar_prefetch = 0 : i64, scratch_operands = 1 : i64, tpu.core_type = #tpu.core_type<tc>} {
    tpu.enqueue_dma source(%arg0 : memref<1x2048xf32, #tpu.memory_space<any>>) target(%arg1 : memref<1x2048xf32, #tpu.memory_space<any>>) target_semaphore(%arg2 : memref<!tpu.dma_semaphore, #tpu.memory_space<semaphore_mem>>)
    tpu.wait_dma2 semaphore(%arg2 : memref<!tpu.dma_semaphore, #tpu.memory_space<semaphore_mem>>) src(%arg0 : memref<1x2048xf32, #tpu.memory_space<any>>) dst(%arg1 : memref<1x2048xf32, #tpu.memory_space<any>>)
    return
  }
}

</mosaic_0001>

<llo_original>
// kernel: tpu_custom_call.1
$region0: #{tpu_custom_call.1}
  #allocation0 [shape = 'u32[]', space=smem, size = 0x4, offset = 0x4, fixed_abs, tag = 'smem constant byte address 0x4 - core index']
  #allocation1 [shape = 'u32[144,128]{1,0:T(1,128)}', space=vmem, size = 0x12000, scoped, tag = 'internal scratch']
  #allocation2 [shape = 's32[1]{0}', space=sflag, size = 0x4, scoped, tag = 'scratch operand']
  #allocation3 [shape = 's32[]', space=sflag, size = 0x4, offset = 0, fixed_abs, tag = 'sflag constant byte address 0x0 - dummy sync flag']
  #allocation4 [shape = 'u32[0]{0}', space=smem, size = 0, offset = 0, fixed_abs, tag = 'smem constant byte address 0x0 - null']
  %s0 = inlined_call_operand.hbm [shape: f32[1,2048], index: 0, kind: input, shape index: {}]
  %s1 = inlined_call_operand.hbm [shape: f32[1,2048], index: 1, kind: output, shape index: {}]
  %s2 = sld [smem:[#allocation0]]
  $region2: #{tpu_custom_call.1} parent=0
    _
  %s4 = ssub.s32 1, %s2
  %s5 = scalar_select 0, %s4, %s2
  %s7 = sshll.u32 1, 14
  %s8 = sxor.u32 4294967295, %s7
  %12 = dma.general %s0, 256, %s1, [#allocation2], 131072, [#allocation4], 0, 0
  %s13 = smul.u32 1, 16
  %s14 = sshll.u32 %s13, 4
  %15 = dma.done [#allocation2], %s14
  %16 = vsyncmov [#allocation2]
  %s17 = vpop.sfrf %16
  %p18 = scmp.eq.s32.totalorder %s17, 0
  %p19 = pneg %p18
  %21 = shalt.err (%p19)

</llo_original>
